<compile_context>
chip_gen: v7x
topology: tpu7x:2x2x1
jax: 0.10.0
libtpu: 0.0.40
codegen_flags: <defaults>
</compile_context>

<pallas_src>
import jax
import jax.numpy as jnp
from jax.experimental import pallas as pl
from jax.experimental.pallas import tpu as pltpu


def _simplex_mlp_kernel(alpha_ref, x_ref, eye_ref, w1t_ref, b1t_ref,
                        w2t_ref, b2t_ref, ot_ref):
    # alpha: scalar-prefetched (SMEM), read once up front.
    alpha = alpha_ref[0]

    x_nat = x_ref[...]                                  # (TB, D), natural layout

    # Lane-densify on the MXU: xt[f, b] = sum_d eye[f, d] * x_nat[b, d]  -> x^T.
    # NT dot_general (contract both minor dims) == attention-score pattern;
    # avoids any explicit transpose/relayout op and any HBM-level transpose.
    xt = jax.lax.dot_general(
        eye_ref[...], x_nat,
        dimension_numbers=(((1,), (1,)), ((), ())),
        preferred_element_type=jnp.float32)             # (D, TB), lane-dense

    # --- simplex projection: softmax over the feature axis (axis 0 here) ----
    m = jnp.max(xt, axis=0, keepdims=True)              # (1, TB)
    e = jnp.exp(xt - m)                                  # (D, TB)
    denom = jnp.sum(e, axis=0, keepdims=True)            # (1, TB)
    p = e / denom                                        # exact normalization

    # --- ShallowMLP hot path: Linear -> ReLU -> (dropout=id) -> Linear ------
    # h^T = W1^T @ p^T ; y^T = W2^T @ h^T   (all lane-dense, plain NN matmuls)
    h = jnp.dot(w1t_ref[...], p, preferred_element_type=jnp.float32)
    h = jnp.maximum(h + b1t_ref[...], 0.0)               # (H, TB)
    y = jnp.dot(w2t_ref[...], h, preferred_element_type=jnp.float32)
    y = y + b2t_ref[...]                                  # (D, TB)

    # --- learnable scalar skip connection on the raw (pre-softmax) input ----
    # Lane-dense store: full-width (unmasked) vst.
    ot_ref[...] = y + alpha * xt


def _pick_tile_b(B):
    """Largest batch tile dividing B; prefer >=4 grid steps (2 per v7x core)."""
    candidates = (16384, 8192, 4096, 2048, 1024, 512, 256, 128)
    for min_steps in (4, 2, 1):
        for c in candidates:
            if B % c == 0 and B // c >= min_steps:
                return c
    return B  # small / indivisible batch: single full-batch block (correct,
              # but disables pipelining; pad B upstream for production use)


def simplex_shallow_mlp(x, w1, b1, w2, b2, alpha, *, tile_b=None,
                        transpose_output=True):
    """SimplexShallowMLP forward.

    x: (B, D) f32; w1: (D, H); b1: (H,) or (1, H); w2: (H, D); b2: (D,) or
    (1, D); alpha: scalar / (1,) learnable skip weight.

    Returns (B, D) if transpose_output else the kernel-native (D, B) layout
    (no activation transpose anywhere in that case).
    """
    B, D = x.shape
    H = w1.shape[1]
    assert w1.shape == (D, H) and w2.shape == (H, D)

    b1 = jnp.asarray(b1, jnp.float32).reshape(-1)
    b2 = jnp.asarray(b2, jnp.float32).reshape(-1)
    assert b1.shape == (H,) and b2.shape == (D,), "bias shapes must be (H,)/(D,)"
    alpha = jnp.asarray(alpha, jnp.float32).reshape(1)

    if tile_b is None:
        tile_b = _pick_tile_b(B)
    assert B % tile_b == 0, "batch must be divisible by tile_b"

    # Tiny, one-time parameter plumbing (weights pre-transposed for the
    # lane-dense matmuls; biases as column vectors broadcasting along lanes).
    eye_d = jnp.eye(D, dtype=jnp.float32)
    w1t = jnp.transpose(w1).astype(jnp.float32)   # (H, D)
    w2t = jnp.transpose(w2).astype(jnp.float32)   # (D, H)
    b1t = b1.reshape(H, 1)
    b2t = b2.reshape(D, 1)

    grid = (B // tile_b,)
    out_t = pl.pallas_call(
        _simplex_mlp_kernel,
        out_shape=jax.ShapeDtypeStruct((D, B), jnp.float32),
        grid_spec=pltpu.PrefetchScalarGridSpec(
            num_scalar_prefetch=1,                # alpha -> SMEM before the grid
            grid=grid,
            in_specs=[
                # activations: natural (tile_b, D) blocks of untransposed x
                pl.BlockSpec((tile_b, D), lambda i, alpha_ref: (i, 0)),
                # identity for the in-kernel MXU lane-densify
                pl.BlockSpec((D, D), lambda i, alpha_ref: (0, 0)),
                # weights / biases: tiny full blocks, resident across the grid
                pl.BlockSpec((H, D), lambda i, alpha_ref: (0, 0)),
                pl.BlockSpec((H, 1), lambda i, alpha_ref: (0, 0)),
                pl.BlockSpec((D, H), lambda i, alpha_ref: (0, 0)),
                pl.BlockSpec((D, 1), lambda i, alpha_ref: (0, 0)),
            ],
            # lane-dense output blocks -> unmasked full-width stores
            out_specs=pl.BlockSpec((D, tile_b), lambda i, alpha_ref: (0, i)),
        ),
        compiler_params=pltpu.CompilerParams(
            dimension_semantics=("parallel",),     # shards grid on v7x's 2 TCs
            vmem_limit_bytes=48 * 1024 * 1024,     # explicit budget (v5e/v7x safe)
        ),
    )(alpha, x, eye_d, w1t, b1t, w2t, b2t)

    if transpose_output:
        # Consumer-boundary layout change only (module contract is (B, D)).
        return jnp.transpose(out_t)
    return out_t


def _reference(x, w1, b1, w2, b2, alpha):
    p = jax.nn.softmax(x, axis=-1)
    h = jnp.maximum(p @ w1 + b1.reshape(1, -1), 0.0)
    y = h @ w2 + b2.reshape(1, -1)
    return y + jnp.asarray(alpha).reshape(()) * x


if __name__ == "__main__":
    # Small demo shapes consistent with the module: data_dim=16, hidden_dim=32.
    # Batch 512 -> tile_b=128, 4 grid steps.  (Do NOT tune/benchmark at this
    # size; use production batch + xprof for that.)
    B, D, H = 512, 16, 32

    key = jax.random.PRNGKey(0)
    kx, k1, kb1, k2, kb2 = jax.random.split(key, 5)

    # PyTorch-Linear-style init: U(-1/sqrt(fan_in), 1/sqrt(fan_in)).
    lim1 = 1.0 / jnp.sqrt(D)
    lim2 = 1.0 / jnp.sqrt(H)
    w1 = jax.random.uniform(k1, (D, H), jnp.float32, -lim1, lim1)
    b1 = jax.random.uniform(kb1, (H,), jnp.float32, -lim1, lim1)
    w2 = jax.random.uniform(k2, (H, D), jnp.float32, -lim2, lim2)
    b2 = jax.random.uniform(kb2, (D,), jnp.float32, -lim2, lim2)
    alpha = jnp.ones((1,), jnp.float32)          # learnable skip, init 1.0

    x = jax.random.normal(kx, (B, D), jnp.float32)

    out = simplex_shallow_mlp(x, w1, b1, w2, b2, alpha)
    out = jax.block_until_ready(out)

    ref = _reference(x, w1, b1, w2, b2, alpha)
    assert out.shape == (B, D)
    # Tolerance accounts for default-precision f32 MXU passes (identity
    # lane-densify + the two tiny matmuls); exact-divide softmax otherwise.
    assert jnp.allclose(out, ref, atol=5e-2, rtol=2e-2), "mismatch vs reference"

    print("KERNEL_OK")
</pallas_src>

<mosaic_0001>
module attributes {stable_mosaic.version = 11 : i64} {
  func.func @_simplex_mlp_kernel(%arg0: i32, %arg1: memref<1xf32, #tpu.memory_space<smem>>, %arg2: memref<128x16xf32, #tpu.memory_space<vmem>>, %arg3: memref<16x16xf32, #tpu.memory_space<vmem>>, %arg4: memref<32x16xf32, #tpu.memory_space<vmem>>, %arg5: memref<32x1xf32, #tpu.memory_space<vmem>>, %arg6: memref<16x32xf32, #tpu.memory_space<vmem>>, %arg7: memref<16x1xf32, #tpu.memory_space<vmem>>, %arg8: memref<16x128xf32, #tpu.memory_space<vmem>>) attributes {dimension_semantics = [#tpu.dimension_semantics<parallel>], iteration_bounds = array<i64: 4>, scalar_prefetch = 1 : i64, scratch_operands = 0 : i64, tpu.core_type = #tpu.core_type<tc>, window_params = [{transform_indices = @transform_0, window_bounds = array<i64: 128, 16>}, {pipeline_mode = #tpu.pipeline_mode<synchronous>, transform_indices = @transform_1, window_bounds = array<i64: 16, 16>}, {pipeline_mode = #tpu.pipeline_mode<synchronous>, transform_indices = @transform_2, window_bounds = array<i64: 32, 16>}, {pipeline_mode = #tpu.pipeline_mode<synchronous>, transform_indices = @transform_3, window_bounds = array<i64: 32, 1>}, {pipeline_mode = #tpu.pipeline_mode<synchronous>, transform_indices = @transform_4, window_bounds = array<i64: 16, 32>}, {pipeline_mode = #tpu.pipeline_mode<synchronous>, transform_indices = @transform_5, window_bounds = array<i64: 16, 1>}, {transform_indices = @transform_6, window_bounds = array<i64: 16, 128>}]} {
    %c0 = arith.constant 0 : index
    %0 = memref.load %arg1[%c0] : memref<1xf32, #tpu.memory_space<smem>>
    %c0_0 = arith.constant 0 : index
    %c0_1 = arith.constant 0 : index
    %1 = vector.load %arg2[%c0_0, %c0_1] : memref<128x16xf32, #tpu.memory_space<vmem>>, vector<128x16xf32>
    %c0_2 = arith.constant 0 : index
    %c0_3 = arith.constant 0 : index
    %2 = vector.load %arg3[%c0_2, %c0_3] : memref<16x16xf32, #tpu.memory_space<vmem>>, vector<16x16xf32>
    %cst = arith.constant dense<0.000000e+00> : vector<16x128xf32>
    %3 = tpu.matmul %2, %1, %cst {dimension_numbers = #tpu.dot_dimension_numbers<[1], [1], [0], [0], [0, 0, 1, 0], [], []>} : vector<16x16xf32>, vector<128x16xf32>, vector<16x128xf32> -> vector<16x128xf32>
    %cst_4 = arith.constant dense<0xFF800000> : vector<128xf32>
    %4 = vector.multi_reduction <maximumf>, %3, %cst_4 [0] : vector<16x128xf32> to vector<128xf32>
    %5 = vector.shape_cast %4 : vector<128xf32> to vector<1x128xf32>
    %6 = vector.broadcast %5 : vector<1x128xf32> to vector<16x128xf32>
    %7 = arith.subf %3, %6 : vector<16x128xf32>
    %8 = math.exp %7 : vector<16x128xf32>
    %cst_5 = arith.constant dense<0.000000e+00> : vector<128xf32>
    %9 = vector.multi_reduction <add>, %8, %cst_5 [0] : vector<16x128xf32> to vector<128xf32>
    %10 = vector.shape_cast %9 : vector<128xf32> to vector<1x128xf32>
    %11 = vector.broadcast %10 : vector<1x128xf32> to vector<16x128xf32>
    %12 = arith.divf %8, %11 : vector<16x128xf32>
    %c0_6 = arith.constant 0 : index
    %c0_7 = arith.constant 0 : index
    %13 = vector.load %arg4[%c0_6, %c0_7] : memref<32x16xf32, #tpu.memory_space<vmem>>, vector<32x16xf32>
    %cst_8 = arith.constant dense<0.000000e+00> : vector<32x128xf32>
    %14 = tpu.matmul %13, %12, %cst_8 {dimension_numbers = #tpu.dot_dimension_numbers<[1], [0], [0], [1], [0, 0, 1, 1], [], []>} : vector<32x16xf32>, vector<16x128xf32>, vector<32x128xf32> -> vector<32x128xf32>
    %c0_9 = arith.constant 0 : index
    %c0_10 = arith.constant 0 : index
    %15 = vector.load %arg5[%c0_9, %c0_10] : memref<32x1xf32, #tpu.memory_space<vmem>>, vector<32x1xf32>
    %16 = vector.broadcast %15 : vector<32x1xf32> to vector<32x128xf32>
    %17 = arith.addf %14, %16 : vector<32x128xf32>
    %cst_11 = arith.constant 0.000000e+00 : f32
    %18 = vector.broadcast %cst_11 : f32 to vector<32x128xf32>
    %19 = arith.maximumf %17, %18 : vector<32x128xf32>
    %c0_12 = arith.constant 0 : index
    %c0_13 = arith.constant 0 : index
    %20 = vector.load %arg6[%c0_12, %c0_13] : memref<16x32xf32, #tpu.memory_space<vmem>>, vector<16x32xf32>
    %cst_14 = arith.constant dense<0.000000e+00> : vector<16x128xf32>
    %21 = tpu.matmul %20, %19, %cst_14 {dimension_numbers = #tpu.dot_dimension_numbers<[1], [0], [0], [1], [0, 0, 1, 1], [], []>} : vector<16x32xf32>, vector<32x128xf32>, vector<16x128xf32> -> vector<16x128xf32>
    %c0_15 = arith.constant 0 : index
    %c0_16 = arith.constant 0 : index
    %22 = vector.load %arg7[%c0_15, %c0_16] : memref<16x1xf32, #tpu.memory_space<vmem>>, vector<16x1xf32>
    %23 = vector.broadcast %22 : vector<16x1xf32> to vector<16x128xf32>
    %24 = arith.addf %21, %23 : vector<16x128xf32>
    %25 = vector.broadcast %0 : f32 to vector<16x128xf32>
    %26 = arith.mulf %25, %3 : vector<16x128xf32>
    %27 = arith.addf %24, %26 : vector<16x128xf32>
    %c0_17 = arith.constant 0 : index
    %c0_18 = arith.constant 0 : index
    %28 = vector.load %arg8[%c0_17, %c0_18] : memref<16x128xf32, #tpu.memory_space<vmem>>, vector<16x128xf32>
    tpu.vector_store %arg8[%c0_17, %c0_18], %27 {strides = array<i32>} : memref<16x128xf32, #tpu.memory_space<vmem>>, vector<16x128xf32>,
    return
  }
  func.func @transform_0(%arg0: i32, %arg1: memref<1xf32, #tpu.memory_space<smem>>) -> (i32, i32) {
    %c0_i32 = arith.constant 0 : i32
    %c0_i32_0 = arith.constant 0 : i32
    return %arg0, %c0_i32 : i32, i32
  }
  func.func @transform_1(%arg0: i32, %arg1: memref<1xf32, #tpu.memory_space<smem>>) -> (i32, i32) {
    %c0_i32 = arith.constant 0 : i32
    %c0_i32_0 = arith.constant 0 : i32
    %c0_i32_1 = arith.constant 0 : i32
    return %c0_i32, %c0_i32_0 : i32, i32
  }
  func.func @transform_2(%arg0: i32, %arg1: memref<1xf32, #tpu.memory_space<smem>>) -> (i32, i32) {
    %c0_i32 = arith.constant 0 : i32
    %c0_i32_0 = arith.constant 0 : i32
    %c0_i32_1 = arith.constant 0 : i32
    return %c0_i32, %c0_i32_0 : i32, i32
  }
  func.func @transform_3(%arg0: i32, %arg1: memref<1xf32, #tpu.memory_space<smem>>) -> (i32, i32) {
    %c0_i32 = arith.constant 0 : i32
    %c0_i32_0 = arith.constant 0 : i32
    %c0_i32_1 = arith.constant 0 : i32
    return %c0_i32, %c0_i32_0 : i32, i32
  }
  func.func @transform_4(%arg0: i32, %arg1: memref<1xf32, #tpu.memory_space<smem>>) -> (i32, i32) {
    %c0_i32 = arith.constant 0 : i32
    %c0_i32_0 = arith.constant 0 : i32
    %c0_i32_1 = arith.constant 0 : i32
    return %c0_i32, %c0_i32_0 : i32, i32
  }
  func.func @transform_5(%arg0: i32, %arg1: memref<1xf32, #tpu.memory_space<smem>>) -> (i32, i32) {
    %c0_i32 = arith.constant 0 : i32
    %c0_i32_0 = arith.constant 0 : i32
    %c0_i32_1 = arith.constant 0 : i32
    return %c0_i32, %c0_i32_0 : i32, i32
  }
  func.func @transform_6(%arg0: i32, %arg1: memref<1xf32, #tpu.memory_space<smem>>) -> (i32, i32) {
    %c0_i32 = arith.constant 0 : i32
    %c0_i32_0 = arith.constant 0 : i32
    return %c0_i32, %arg0 : i32, i32
  }
}

</mosaic_0001>

<llo_original>
// kernel: tpu_custom_call.1
$region0: #{tpu_custom_call.1}
  #allocation0 [shape = 'u32[]', space=smem, size = 0x4, offset = 0x4, fixed_abs, tag = 'smem constant byte address 0x4 - core index']
  #allocation1 [shape = 'u32[144,128]{1,0:T(1,128)}', space=vmem, size = 0x12000, scoped, tag = 'internal scratch']
  #allocation2 [shape = 's32[1]{0}', space=sflag, size = 0x4, scoped, tag = 'scoped memory for tpu_custom_call.1']
  #allocation3 [shape = 'f32[1]{0:T(128)S(6)}', space=smem, size = 0x200, scoped, tag = 'prefetched SMEM operand 0']
  %s0 = inlined_call_operand.<no memory space> [shape: f32[1], index: 0, kind: input, shape index: {}]
  %s1 = inlined_call_operand.vmem [shape: f32[512,16], index: 1, kind: input, shape index: {}]
  %s2 = inlined_call_operand.vmem [shape: f32[16,16], index: 2, kind: input, shape index: {}]
  %s3 = inlined_call_operand.vmem [shape: f32[32,16], index: 3, kind: input, shape index: {}]
  %s4 = inlined_call_operand.vmem [shape: f32[32,1], index: 4, kind: input, shape index: {}]
  %s5 = inlined_call_operand.vmem [shape: f32[16,32], index: 5, kind: input, shape index: {}]
  %s6 = inlined_call_operand.vmem [shape: f32[16,1], index: 6, kind: input, shape index: {}]
  %s7 = inlined_call_operand.hbm [shape: f32[16,512], index: 7, kind: output, shape index: {}]
  %s8 = sld [smem:[#allocation0]]
  $region57: #{tpu_custom_call.1} parent=0
    _
  %s10 = ssub.s32 1, %s8
  %s11 = scalar_select 0, %s10, %s8
  %12 = sst [smem:[#allocation3]] %s0
  $region1: #{tpu_custom_call.1} parent=0
    #allocation4 [shape = 'u8[16384]{0}', space=vmem, size = 0x4000, scoped, tag = 'output window, operand 0']
    #allocation5 [shape = 's32[2]{0}', space=sflag, size = 0x8, scoped, tag = 'scoped memory for tpu_custom_call.1']
    %13 = vsyncpa [#allocation5], 0
    %s14 = scalar_lea.sflag [#allocation5], 1
    %15 = vsyncpa %s14, 0
    loop: start=0, step=1, limit=6
    $region2: #{tpu_custom_call.1} parent=1 // loop_pre_header
      _
    $region3: #{tpu_custom_call.1} parent=1 // loop_header
      %s17 = sphi 0, %s21
      %p18 = scmp.ge.s32.totalorder %s17, 6
      %s27 = sphi 0, %s29
      %s30 = sphi 0, %s27
      %s31 = sphi 0, %s30
      %s47 = sphi 0, %s31
      %s51 = sphi 0, %s51
      %s53 = sphi 0, %s51
      %s54 = sphi 0, %s53
      %s68 = sphi 0, %s54
      %s72 = sphi 0, %s72
      %s74 = sphi 0, %s72
      %s75 = sphi 0, %s74
      %s89 = sphi 0, %s75
      %s93 = sphi 0, %s93
      %s95 = sphi 0, %s93
      %s96 = sphi 0, %s95
      %s110 = sphi 0, %s96
      %s114 = sphi 0, %s114
      %s116 = sphi 0, %s114
      %s117 = sphi 0, %s116
      %s131 = sphi 0, %s117
      %s135 = sphi 0, %s135
      %s137 = sphi 0, %s135
      %s138 = sphi 0, %s137
      %s152 = sphi 0, %s138
      %s158 = sphi 0, %s160
      %s161 = sphi 0, %s158
      %s162 = sphi 0, %s161
      %s178 = sphi 0, %s162
    $region4: #{tpu_custom_call.1} parent=1 // loop_header_branch
      %20 = sbr.rel (%p18) target = $region8
    $region5: #{tpu_custom_call.1} parent=1 // loop_body
      %s22 = ssub.s32 %s17, 1
      %s23 = ssub.s32 %s17, 2
      %s24 = sadd.s32 %s17, 1
      %s25 = ssub.s32 %s17, %s24
      %p26 = scmp.eq.s32.totalorder %s25, 0
      %s28 = sadd.s32 %s27, 1
      %s29 = scalar_select %p26, %s27, %s28
      %p32 = pneg %p26
      %p33 = scmp.eq.s32.totalorder %s17, 3
      %p34 = por %p32, %p33
      %p35 = scmp.ne.s32.totalorder %s27, %s30
      %p36 = scmp.eq.s32.totalorder %s17, 0
      %p37 = por %p35, %p36
      %p38 = scmp.ne.s32.totalorder %s27, %s30
      %p39 = scmp.eq.s32.totalorder %s22, 3
      %p40 = por %p38, %p39
      %p41 = scmp.ne.s32.totalorder %s30, %s31
      %p42 = scmp.eq.s32.totalorder %s22, 0
      %p43 = por %p41, %p42
      %p44 = scmp.ne.s32.totalorder %s30, %s31
      %p45 = scmp.eq.s32.totalorder %s23, 3
      %p46 = por %p44, %p45
      %p48 = scmp.ne.s32.totalorder %s31, %s47
      %p49 = scmp.eq.s32.totalorder %s23, 0
      %p50 = por %p48, %p49
      %s52 = sadd.s32 %s51, 1
      %p55 = scmp.eq.s32.totalorder %s17, 3
      %p56 = scmp.ne.s32.totalorder %s51, %s53
      %p57 = scmp.eq.s32.totalorder %s17, 0
      %p58 = por %p56, %p57
      %p59 = scmp.ne.s32.totalorder %s51, %s53
      %p60 = scmp.eq.s32.totalorder %s22, 3
      %p61 = por %p59, %p60
      %p62 = scmp.ne.s32.totalorder %s53, %s54
      %p63 = scmp.eq.s32.totalorder %s22, 0
      %p64 = por %p62, %p63
      %p65 = scmp.ne.s32.totalorder %s53, %s54
      %p66 = scmp.eq.s32.totalorder %s23, 3
      %p67 = por %p65, %p66
      %p69 = scmp.ne.s32.totalorder %s54, %s68
      %p70 = scmp.eq.s32.totalorder %s23, 0
      %p71 = por %p69, %p70
      %s73 = sadd.s32 %s72, 1
      %p76 = scmp.eq.s32.totalorder %s17, 3
      %p77 = scmp.ne.s32.totalorder %s72, %s74
      %p78 = scmp.eq.s32.totalorder %s17, 0
      %p79 = por %p77, %p78
      %p80 = scmp.ne.s32.totalorder %s72, %s74
      %p81 = scmp.eq.s32.totalorder %s22, 3
      %p82 = por %p80, %p81
      %p83 = scmp.ne.s32.totalorder %s74, %s75
      %p84 = scmp.eq.s32.totalorder %s22, 0
      %p85 = por %p83, %p84
      %p86 = scmp.ne.s32.totalorder %s74, %s75
      %p87 = scmp.eq.s32.totalorder %s23, 3
      %p88 = por %p86, %p87
      %p90 = scmp.ne.s32.totalorder %s75, %s89
      %p91 = scmp.eq.s32.totalorder %s23, 0
      %p92 = por %p90, %p91
      %s94 = sadd.s32 %s93, 1
      %p97 = scmp.eq.s32.totalorder %s17, 3
      %p98 = scmp.ne.s32.totalorder %s93, %s95
      %p99 = scmp.eq.s32.totalorder %s17, 0
      %p100 = por %p98, %p99
      %p101 = scmp.ne.s32.totalorder %s93, %s95
      %p102 = scmp.eq.s32.totalorder %s22, 3
      %p103 = por %p101, %p102
      %p104 = scmp.ne.s32.totalorder %s95, %s96
      %p105 = scmp.eq.s32.totalorder %s22, 0
      %p106 = por %p104, %p105
      %p107 = scmp.ne.s32.totalorder %s95, %s96
      %p108 = scmp.eq.s32.totalorder %s23, 3
      %p109 = por %p107, %p108
      %p111 = scmp.ne.s32.totalorder %s96, %s110
      %p112 = scmp.eq.s32.totalorder %s23, 0
      %p113 = por %p111, %p112
      %s115 = sadd.s32 %s114, 1
      %p118 = scmp.eq.s32.totalorder %s17, 3
      %p119 = scmp.ne.s32.totalorder %s114, %s116
      %p120 = scmp.eq.s32.totalorder %s17, 0
      %p121 = por %p119, %p120
      %p122 = scmp.ne.s32.totalorder %s114, %s116
      %p123 = scmp.eq.s32.totalorder %s22, 3
      %p124 = por %p122, %p123
      %p125 = scmp.ne.s32.totalorder %s116, %s117
      %p126 = scmp.eq.s32.totalorder %s22, 0
      %p127 = por %p125, %p126
      %p128 = scmp.ne.s32.totalorder %s116, %s117
      %p129 = scmp.eq.s32.totalorder %s23, 3
      %p130 = por %p128, %p129
      %p132 = scmp.ne.s32.totalorder %s117, %s131
      %p133 = scmp.eq.s32.totalorder %s23, 0
      %p134 = por %p132, %p133
      %s136 = sadd.s32 %s135, 1
      %p139 = scmp.eq.s32.totalorder %s17, 3
      %p140 = scmp.ne.s32.totalorder %s135, %s137
      %p141 = scmp.eq.s32.totalorder %s17, 0
      %p142 = por %p140, %p141
      %p143 = scmp.ne.s32.totalorder %s135, %s137
      %p144 = scmp.eq.s32.totalorder %s22, 3
      %p145 = por %p143, %p144
      %p146 = scmp.ne.s32.totalorder %s137, %s138
      %p147 = scmp.eq.s32.totalorder %s22, 0
      %p148 = por %p146, %p147
      %p149 = scmp.ne.s32.totalorder %s137, %s138
      %p150 = scmp.eq.s32.totalorder %s23, 3
      %p151 = por %p149, %p150
      %p153 = scmp.ne.s32.totalorder %s138, %s152
      %p154 = scmp.eq.s32.totalorder %s23, 0
      %p155 = por %p153, %p154
      %s156 = ssub.s32 %s17, %s24
      %p157 = scmp.eq.s32.totalorder %s156, 0
      %s159 = sadd.s32 %s158, 1
      %s160 = scalar_select %p157, %s158, %s159
      %p163 = pneg %p157
      %p164 = scmp.eq.s32.totalorder %s17, 3
      %p165 = por %p163, %p164
      %p166 = scmp.ne.s32.totalorder %s158, %s161
      %p167 = scmp.eq.s32.totalorder %s17, 0
      %p168 = por %p166, %p167
      %p169 = scmp.ne.s32.totalorder %s158, %s161
      %p170 = scmp.eq.s32.totalorder %s22, 3
      %p171 = por %p169, %p170
      %p172 = scmp.ne.s32.totalorder %s161, %s162
      %p173 = scmp.eq.s32.totalorder %s22, 0
      %p174 = por %p172, %p173
      %p175 = scmp.ne.s32.totalorder %s161, %s162
      %p176 = scmp.eq.s32.totalorder %s23, 3
      %p177 = por %p175, %p176
      %p179 = scmp.ne.s32.totalorder %s162, %s178
      %p180 = scmp.eq.s32.totalorder %s23, 0
      %p181 = por %p179, %p180
      %p182 = scmp.le.s32.totalorder 1, %s17
      %p183 = scmp.lt.s32.totalorder %s17, 5
      %p184 = pnand %p182, %p183
      %p185 = pneg %p184
      // Predicated region
      $region9: #{tpu_custom_call.1} parent=5 // pred_check
        _
      $region10: #{tpu_custom_call.1} parent=5 // pred_check_branch
        %187 = sbr.rel (%p184) target = $region12
      $region11: #{tpu_custom_call.1} parent=5 // pred_region
        %s188 = ssub.s32 %s17, 1
        // Predicated region
        $region13: #{tpu_custom_call.1} parent=11 // pred_check
          %p189 = pneg %p64
        $region14: #{tpu_custom_call.1} parent=11 // pred_check_branch
          %191 = sbr.rel (%p189) target = $region16
        $region15: #{tpu_custom_call.1} parent=11 // pred_region
          _
        $region16: #{tpu_custom_call.1} parent=11 // pred_fallthru
          _
        // Predicated region
        $region17: #{tpu_custom_call.1} parent=11 // pred_check
          %p192 = pneg %p85
        $region18: #{tpu_custom_call.1} parent=11 // pred_check_branch
          %194 = sbr.rel (%p192) target = $region20
        $region19: #{tpu_custom_call.1} parent=11 // pred_region
          _
        $region20: #{tpu_custom_call.1} parent=11 // pred_fallthru
          _
        // Predicated region
        $region21: #{tpu_custom_call.1} parent=11 // pred_check
          %p195 = pneg %p106
        $region22: #{tpu_custom_call.1} parent=11 // pred_check_branch
          %197 = sbr.rel (%p195) target = $region24
        $region23: #{tpu_custom_call.1} parent=11 // pred_region
          _
        $region24: #{tpu_custom_call.1} parent=11 // pred_fallthru
          _
        // Predicated region
        $region25: #{tpu_custom_call.1} parent=11 // pred_check
          %p198 = pneg %p127
        $region26: #{tpu_custom_call.1} parent=11 // pred_check_branch
          %200 = sbr.rel (%p198) target = $region28
        $region27: #{tpu_custom_call.1} parent=11 // pred_region
          _
        $region28: #{tpu_custom_call.1} parent=11 // pred_fallthru
          _
        // Predicated region
        $region29: #{tpu_custom_call.1} parent=11 // pred_check
          %p201 = pneg %p148
        $region30: #{tpu_custom_call.1} parent=11 // pred_check_branch
          %203 = sbr.rel (%p201) target = $region32
        $region31: #{tpu_custom_call.1} parent=11 // pred_region
          _
        $region32: #{tpu_custom_call.1} parent=11 // pred_fallthru
          _
      $region12: #{tpu_custom_call.1} parent=5 // pred_fallthru
        _
      %p204 = scmp.lt.s32.totalorder %s17, 4
      // Predicated region
      $region33: #{tpu_custom_call.1} parent=5 // pred_check
        %p205 = pneg %p204
      $region34: #{tpu_custom_call.1} parent=5 // pred_check_branch
        %207 = sbr.rel (%p205) target = $region36
      $region35: #{tpu_custom_call.1} parent=5 // pred_region
        // Predicated region
        $region37: #{tpu_custom_call.1} parent=35 // pred_check
          %p208 = pneg %p37
        $region38: #{tpu_custom_call.1} parent=35 // pred_check_branch
          %210 = sbr.rel (%p208) target = $region40
        $region39: #{tpu_custom_call.1} parent=35 // pred_region
          %s211 = smul.u32 16, %s17
          %p212 = scmp.lt.s32.totalorder %s211, 63
          %s213 = scalar_select %p212, %s211, 63
          %s214 = smul.addr %s213, 8
          %s215 = scalar_lea.vmem %s1, %s214
          %s216 = smul.u32 16, %s17
        $region40: #{tpu_custom_call.1} parent=35 // pred_fallthru
          _
      $region36: #{tpu_custom_call.1} parent=5 // pred_fallthru
        _
      %p217 = scmp.le.s32.totalorder 1, %s17
      %p218 = scmp.lt.s32.totalorder %s17, 5
      %p219 = pnand %p217, %p218
      %p220 = pneg %p219
      // Predicated region
      $region41: #{tpu_custom_call.1} parent=5 // pred_check
        _
      $region42: #{tpu_custom_call.1} parent=5 // pred_check_branch
        %222 = sbr.rel (%p219) target = $region44
      $region43: #{tpu_custom_call.1} parent=5 // pred_region
        %s223 = ssub.s32 %s17, 1
        %s224 = smul.u32 16, %s22
        %p225 = scmp.lt.s32.totalorder %s224, 63
        %s226 = scalar_select %p225, %s224, 63
        %s227 = smul.addr %s226, 8
        %s228 = scalar_lea.vmem %s1, %s227
        %p229 = pneg %p43
        %p230 = pneg %p40
        %p231 = pneg %p64
        %p232 = pneg %p61
        %p233 = pneg %p85
        %p234 = pneg %p82
        %p235 = pneg %p106
        %p236 = pneg %p103
        %p237 = pneg %p127
        %p238 = pneg %p124
        %p239 = pneg %p148
        %p240 = pneg %p145
        %p241 = pneg %p174
        %p242 = pneg %p171
        %s243 = sand.u32 %s161, 1
        %s244 = scalar_lea.sflag [#allocation5], %s243
        %s245 = sand.u32 %s161, 1
        %s246 = smul.addr %s245, 16
        %s247 = scalar_lea.vmem [#allocation4], %s246
        %s248 = smul.u32 16, %s22
        %p249 = scmp.lt.s32.totalorder %s248, 63
        %s250 = scalar_select %p249, %s248, 63
        %s251 = smul.addr %s250, 8
        %s252 = scalar_lea.vmem %s1, %s251
        %s253 = smul.u32 16, %s22
        %s254 = sld [smem:[#allocation3]]
        %v255 = vld [vmem:[%s252] sm:$0xff]
        %v256 = vld [vmem:[%s252 + $0x8] sm:$0xff]
        %v257 = vld [vmem:[%s252 + $0x10] sm:$0xff]
        %v258 = vld [vmem:[%s252 + $0x18] sm:$0xff]
        %v259 = vld [vmem:[%s252 + $0x20] sm:$0xff]
        %v260 = vld [vmem:[%s252 + $0x28] sm:$0xff]
        %v261 = vld [vmem:[%s252 + $0x30] sm:$0xff]
        %v262 = vld [vmem:[%s252 + $0x38] sm:$0xff]
        %v263 = vld [vmem:[%s252 + $0x40] sm:$0xff]
        %v264 = vld [vmem:[%s252 + $0x48] sm:$0xff]
        %v265 = vld [vmem:[%s252 + $0x50] sm:$0xff]
        %v266 = vld [vmem:[%s252 + $0x58] sm:$0xff]
        %v267 = vld [vmem:[%s252 + $0x60] sm:$0xff]
        %v268 = vld [vmem:[%s252 + $0x68] sm:$0xff]
        %v269 = vld [vmem:[%s252 + $0x70] sm:$0xff]
        %v270 = vld [vmem:[%s252 + $0x78] sm:$0xff]
        %v271 = vld [vmem:[%s2] sm:$0xff]
        %v272 = vld [vmem:[%s2 + $0x8] sm:$0xff]
        %vm273 = vcmask 130048
        %v275 = vsel %vm273, %v271, 0
        %v278 = vsel %vm273, %v272, 0
        %v281 = vsel %vm273, %v255, 0
        %v284 = vsel %vm273, %v256, 0
        %v287 = vsel %vm273, %v257, 0
        %v290 = vsel %vm273, %v258, 0
        %v293 = vsel %vm273, %v259, 0
        %v296 = vsel %vm273, %v260, 0
        %v299 = vsel %vm273, %v261, 0
        %v302 = vsel %vm273, %v262, 0
        %v305 = vsel %vm273, %v263, 0
        %v308 = vsel %vm273, %v264, 0
        %v311 = vsel %vm273, %v265, 0
        %v314 = vsel %vm273, %v266, 0
        %v317 = vsel %vm273, %v267, 0
        %v320 = vsel %vm273, %v268, 0
        %v323 = vsel %vm273, %v269, 0
        %v326 = vsel %vm273, %v270, 0
        %328 = vmatprep.subr.mxu0 0.0
        %329 = vmatpush1.xpose.msra.mxu0 %v281
        %330 = vmatprep.subr.mxu0 0.0
        %331 = vmatpush1.xpose.msra.mxu0 %v284
        %332 = vmatprep.subr.mxu0 0.0
        %333 = vmatpush1.xpose.msra.mxu0 %v287
        %334 = vmatprep.subr.mxu0 0.0
        %335 = vmatpush1.xpose.msra.mxu0 %v290
        %336 = vmatprep.subr.mxu0 0.0
        %337 = vmatpush1.xpose.msra.mxu0 %v293
        %338 = vmatprep.subr.mxu0 0.0
        %339 = vmatpush1.xpose.msra.mxu0 %v296
        %340 = vmatprep.subr.mxu0 0.0
        %341 = vmatpush1.xpose.msra.mxu0 %v299
        %342 = vmatprep.subr.mxu0 0.0
        %343 = vmatpush1.xpose.msra.mxu0 %v302
        %344 = vmatprep.subr.mxu0 0.0
        %345 = vmatpush1.xpose.msra.mxu0 %v305
        %346 = vmatprep.subr.mxu0 0.0
        %347 = vmatpush1.xpose.msra.mxu0 %v308
        %348 = vmatprep.subr.mxu0 0.0
        %349 = vmatpush1.xpose.msra.mxu0 %v311
        %350 = vmatprep.subr.mxu0 0.0
        %351 = vmatpush1.xpose.msra.mxu0 %v314
        %352 = vmatprep.subr.mxu0 0.0
        %353 = vmatpush1.xpose.msra.mxu0 %v317
        %354 = vmatprep.subr.mxu0 0.0
        %355 = vmatpush1.xpose.msra.mxu0 %v320
        %356 = vmatprep.subr.mxu0 0.0
        %357 = vmatpush1.xpose.msra.mxu0 %v323
        %358 = vmatprep.subr.mxu0 0.0
        %359 = vmatpush1.xpose.msra.mxu0 %v326
        %360 = vmatprep.subr.mxu0 0.0
        %361 = vmatpush1.xpose.msra.mxu0 0.0
        %362 = vmatprep.subr.mxu0 0.0
        %363 = vmatpush1.xpose.msra.mxu0 0.0
        %364 = vmatprep.subr.mxu0 0.0
        %365 = vmatpush1.xpose.msra.mxu0 0.0
        %366 = vmatprep.subr.mxu0 0.0
        %367 = vmatpush1.xpose.msra.mxu0 0.0
        %368 = vmatprep.subr.mxu0 0.0
        %369 = vmatpush1.xpose.msra.mxu0 0.0
        %370 = vmatprep.subr.mxu0 0.0
        %371 = vmatpush1.xpose.msra.mxu0 0.0
        %372 = vmatprep.subr.mxu0 0.0
        %373 = vmatpush1.xpose.msra.mxu0 0.0
        %374 = vmatprep.subr.mxu0 0.0
        %375 = vmatpush1.xpose.msra.mxu0 0.0
        %376 = vmatprep.subr.mxu0 0.0
        %377 = vmatpush1.xpose.msra.mxu0 0.0
        %378 = vmatprep.subr.mxu0 0.0
        %379 = vmatpush1.xpose.msra.mxu0 0.0
        %380 = vmatprep.subr.mxu0 0.0
        %381 = vmatpush1.xpose.msra.mxu0 0.0
        %382 = vmatprep.subr.mxu0 0.0
        %383 = vmatpush1.xpose.msra.mxu0 0.0
        %384 = vmatprep.subr.mxu0 0.0
        %385 = vmatpush1.xpose.msra.mxu0 0.0
        %386 = vmatprep.subr.mxu0 0.0
        %387 = vmatpush1.xpose.msra.mxu0 0.0
        %388 = vmatprep.subr.mxu0 0.0
        %389 = vmatpush1.xpose.msra.mxu0 0.0
        %390 = vmatprep.subr.mxu0 0.0
        %391 = vmatpush1.xpose.msra.mxu0 0.0
        %392 = vmatprep.mubr.f32.mxu0 0.0
        %393 = vmatmul.mubr.f32.gmra.mrb[0].mxu0 %v275
        %v394 = vpop.f32.mrb[0].mxu0
        %v395 = vadd.f32 0.0, %v394
        %v396 = vpop.f32.mrb[0].mxu0
        %397 = vmatprep.mubr.f32.mxu0 0.0
        %398 = vmatmul.mubr.f32.gmra.mrb[0].mxu0 %v278
        %v399 = vpop.f32.mrb[0].mxu0
        %v400 = vadd.f32 0.0, %v399
        %v401 = vpop.f32.mrb[0].mxu0
        %402 = vdwg.mxu0
        %v403 = vmax.f32 %v395, %v400
        %v404 = vrot.slane %v403, 4
        %v405 = vmax.f32 %v403, %v404
        %v406 = vrot.slane %v405, 2
        %v407 = vmax.f32 %v405, %v406
        %v408 = vrot.slane %v407, 1
        %v409 = vmax.f32 %v407, %v408
        %v410 = vsub.f32 %v395, %v409
        %v411 = vsub.f32 %v400, %v409
        %v412 = vmul.f32 %v410, 1.442695
        %v413 = vpow.pop %v412
        %v414 = vmul.f32 %v411, 1.442695
        %v415 = vpow.pop %v414
        %v416 = vadd.f32 %v413, %v415
        %v417 = vrot.slane %v416, 4
        %v418 = vadd.f32 %v416, %v417
        %v419 = vrot.slane %v418, 2
        %v420 = vadd.f32 %v418, %v419
        %v421 = vrot.slane %v420, 1
        %v422 = vadd.f32 %v420, %v421
        %v423 = vrcp.pop %v422
        %v424 = vmul.f32 %v413, %v423
        %v425 = vmul.f32 %v415, %v423
        %v426 = vld [vmem:[%s3] sm:$0xff]
        %v427 = vld [vmem:[%s3 + $0x8] sm:$0xff]
        %v428 = vld [vmem:[%s3 + $0x10] sm:$0xff]
        %v429 = vld [vmem:[%s3 + $0x18] sm:$0xff]
        %v430 = vld [vmem:[%s4] sm:$0xff]
        %v431 = vld [vmem:[%s4 + $0x8] sm:$0xff]
        %v432 = vld [vmem:[%s4 + $0x10] sm:$0xff]
        %v433 = vld [vmem:[%s4 + $0x18] sm:$0xff]
        %435 = vset.pattern.permute.xlu0 0
        %436 = vperm.xlu0 %435, %v430
        %v437 = vpop.permute.xlu0 %436
        %440 = vset.pattern.permute.xlu0 0
        %441 = vperm.xlu0 %440, %v431
        %v442 = vpop.permute.xlu0 %441
        %445 = vset.pattern.permute.xlu0 0
        %446 = vperm.xlu0 %445, %v432
        %v447 = vpop.permute.xlu0 %446
        %450 = vset.pattern.permute.xlu0 0
        %451 = vperm.xlu0 %450, %v433
        %v452 = vpop.permute.xlu0 %451
        %v455 = vsel %vm273, %v426, 0
        %v458 = vsel %vm273, %v427, 0
        %v461 = vsel %vm273, %v428, 0
        %v464 = vsel %vm273, %v429, 0
        %466 = vmatprep.subr.mxu0 0.0
        %467 = vmatpush1.msra.mxu0 %v424
        %468 = vmatprep.subr.mxu0 0.0
        %469 = vmatpush1.msra.mxu0 %v425
        %470 = vmatprep.subr.mxu0 0.0
        %471 = vmatpush1.msra.mxu0 0.0
        %472 = vmatprep.subr.mxu0 0.0
        %473 = vmatpush1.msra.mxu0 0.0
        %474 = vmatprep.subr.mxu0 0.0
        %475 = vmatpush1.msra.mxu0 0.0
        %476 = vmatprep.subr.mxu0 0.0
        %477 = vmatpush1.msra.mxu0 0.0
        %478 = vmatprep.subr.mxu0 0.0
        %479 = vmatpush1.msra.mxu0 0.0
        %480 = vmatprep.subr.mxu0 0.0
        %481 = vmatpush1.msra.mxu0 0.0
        %482 = vmatprep.subr.mxu0 0.0
        %483 = vmatpush1.msra.mxu0 0.0
        %484 = vmatprep.subr.mxu0 0.0
        %485 = vmatpush1.msra.mxu0 0.0
        %486 = vmatprep.subr.mxu0 0.0
        %487 = vmatpush1.msra.mxu0 0.0
        %488 = vmatprep.subr.mxu0 0.0
        %489 = vmatpush1.msra.mxu0 0.0
        %490 = vmatprep.subr.mxu0 0.0
        %491 = vmatpush1.msra.mxu0 0.0
        %492 = vmatprep.subr.mxu0 0.0
        %493 = vmatpush1.msra.mxu0 0.0
        %494 = vmatprep.subr.mxu0 0.0
        %495 = vmatpush1.msra.mxu0 0.0
        %496 = vmatprep.subr.mxu0 0.0
        %497 = vmatpush1.msra.mxu0 0.0
        %498 = vmatprep.subr.mxu0 0.0
        %499 = vmatpush1.msra.mxu0 0.0
        %500 = vmatprep.subr.mxu0 0.0
        %501 = vmatpush1.msra.mxu0 0.0
        %502 = vmatprep.subr.mxu0 0.0
        %503 = vmatpush1.msra.mxu0 0.0
        %504 = vmatprep.subr.mxu0 0.0
        %505 = vmatpush1.msra.mxu0 0.0
        %506 = vmatprep.subr.mxu0 0.0
        %507 = vmatpush1.msra.mxu0 0.0
        %508 = vmatprep.subr.mxu0 0.0
        %509 = vmatpush1.msra.mxu0 0.0
        %510 = vmatprep.subr.mxu0 0.0
        %511 = vmatpush1.msra.mxu0 0.0
        %512 = vmatprep.subr.mxu0 0.0
        %513 = vmatpush1.msra.mxu0 0.0
        %514 = vmatprep.subr.mxu0 0.0
        %515 = vmatpush1.msra.mxu0 0.0
        %516 = vmatprep.subr.mxu0 0.0
        %517 = vmatpush1.msra.mxu0 0.0
        %518 = vmatprep.subr.mxu0 0.0
        %519 = vmatpush1.msra.mxu0 0.0
        %520 = vmatprep.subr.mxu0 0.0
        %521 = vmatpush1.msra.mxu0 0.0
        %522 = vmatprep.subr.mxu0 0.0
        %523 = vmatpush1.msra.mxu0 0.0
        %524 = vmatprep.subr.mxu0 0.0
        %525 = vmatpush1.msra.mxu0 0.0
        %526 = vmatprep.subr.mxu0 0.0
        %527 = vmatpush1.msra.mxu0 0.0
        %528 = vmatprep.subr.mxu0 0.0
        %529 = vmatpush1.msra.mxu0 0.0
        %530 = vmatprep.mubr.f32.mxu0 0.0
        %531 = vmatmul.mubr.f32.gmra.mrb[0].mxu0 %v455
        %v532 = vpop.f32.mrb[0].mxu0
        %v533 = vadd.f32 %v437, %v532
        %v534 = vpop.f32.mrb[0].mxu0
        %535 = vmatprep.mubr.f32.mxu0 0.0
        %536 = vmatmul.mubr.f32.gmra.mrb[0].mxu0 %v458
        %v537 = vpop.f32.mrb[0].mxu0
        %v538 = vadd.f32 %v442, %v537
        %v539 = vpop.f32.mrb[0].mxu0
        %540 = vmatprep.mubr.f32.mxu0 0.0
        %541 = vmatmul.mubr.f32.gmra.mrb[0].mxu0 %v461
        %v542 = vpop.f32.mrb[0].mxu0
        %v543 = vadd.f32 %v447, %v542
        %v544 = vpop.f32.mrb[0].mxu0
        %545 = vmatprep.mubr.f32.mxu0 0.0
        %546 = vmatmul.mubr.f32.gmra.mrb[0].mxu0 %v464
        %v547 = vpop.f32.mrb[0].mxu0
        %v548 = vadd.f32 %v452, %v547
        %v549 = vpop.f32.mrb[0].mxu0
        %550 = vdwg.mxu0
        %v551 = vmax.f32 %v533, 0.0
        %v552 = vmax.f32 %v538, 0.0
        %v553 = vmax.f32 %v543, 0.0
        %v554 = vmax.f32 %v548, 0.0
        %v555 = vld [vmem:[%s5] sm:$0xff]
        %v556 = vld [vmem:[%s5 + $0x8] sm:$0xff]
        %v557 = vld [vmem:[%s6] sm:$0xff]
        %v558 = vld [vmem:[%s6 + $0x8] sm:$0xff]
        %560 = vset.pattern.permute.xlu0 0
        %561 = vperm.xlu0 %560, %v557
        %v562 = vpop.permute.xlu0 %561
        %565 = vset.pattern.permute.xlu0 0
        %566 = vperm.xlu0 %565, %v558
        %v567 = vpop.permute.xlu0 %566
        %vm569 = vcmask 261120
        %v571 = vsel %vm569, %v555, 0
        %v574 = vsel %vm569, %v556, 0
        %576 = vmatprep.subr.mxu0 0.0
        %577 = vmatpush1.msra.mxu0 %v551
        %578 = vmatprep.subr.mxu0 0.0
        %579 = vmatpush1.msra.mxu0 %v552
        %580 = vmatprep.subr.mxu0 0.0
        %581 = vmatpush1.msra.mxu0 %v553
        %582 = vmatprep.subr.mxu0 0.0
        %583 = vmatpush1.msra.mxu0 %v554
        %584 = vmatprep.subr.mxu0 0.0
        %585 = vmatpush1.msra.mxu0 0.0
        %586 = vmatprep.subr.mxu0 0.0
        %587 = vmatpush1.msra.mxu0 0.0
        %588 = vmatprep.subr.mxu0 0.0
        %589 = vmatpush1.msra.mxu0 0.0
        %590 = vmatprep.subr.mxu0 0.0
        %591 = vmatpush1.msra.mxu0 0.0
        %592 = vmatprep.subr.mxu0 0.0
        %593 = vmatpush1.msra.mxu0 0.0
        %594 = vmatprep.subr.mxu0 0.0
        %595 = vmatpush1.msra.mxu0 0.0
        %596 = vmatprep.subr.mxu0 0.0
        %597 = vmatpush1.msra.mxu0 0.0
        %598 = vmatprep.subr.mxu0 0.0
        %599 = vmatpush1.msra.mxu0 0.0
        %600 = vmatprep.subr.mxu0 0.0
        %601 = vmatpush1.msra.mxu0 0.0
        %602 = vmatprep.subr.mxu0 0.0
        %603 = vmatpush1.msra.mxu0 0.0
        %604 = vmatprep.subr.mxu0 0.0
        %605 = vmatpush1.msra.mxu0 0.0
        %606 = vmatprep.subr.mxu0 0.0
        %607 = vmatpush1.msra.mxu0 0.0
        %608 = vmatprep.subr.mxu0 0.0
        %609 = vmatpush1.msra.mxu0 0.0
        %610 = vmatprep.subr.mxu0 0.0
        %611 = vmatpush1.msra.mxu0 0.0
        %612 = vmatprep.subr.mxu0 0.0
        %613 = vmatpush1.msra.mxu0 0.0
        %614 = vmatprep.subr.mxu0 0.0
        %615 = vmatpush1.msra.mxu0 0.0
        %616 = vmatprep.subr.mxu0 0.0
        %617 = vmatpush1.msra.mxu0 0.0
        %618 = vmatprep.subr.mxu0 0.0
        %619 = vmatpush1.msra.mxu0 0.0
        %620 = vmatprep.subr.mxu0 0.0
        %621 = vmatpush1.msra.mxu0 0.0
        %622 = vmatprep.subr.mxu0 0.0
        %623 = vmatpush1.msra.mxu0 0.0
        %624 = vmatprep.subr.mxu0 0.0
        %625 = vmatpush1.msra.mxu0 0.0
        %626 = vmatprep.subr.mxu0 0.0
        %627 = vmatpush1.msra.mxu0 0.0
        %628 = vmatprep.subr.mxu0 0.0
        %629 = vmatpush1.msra.mxu0 0.0
        %630 = vmatprep.subr.mxu0 0.0
        %631 = vmatpush1.msra.mxu0 0.0
        %632 = vmatprep.subr.mxu0 0.0
        %633 = vmatpush1.msra.mxu0 0.0
        %634 = vmatprep.subr.mxu0 0.0
        %635 = vmatpush1.msra.mxu0 0.0
        %636 = vmatprep.subr.mxu0 0.0
        %637 = vmatpush1.msra.mxu0 0.0
        %638 = vmatprep.subr.mxu0 0.0
        %639 = vmatpush1.msra.mxu0 0.0
        %640 = vmatprep.mubr.f32.mxu0 0.0
        %641 = vmatmul.mubr.f32.gmra.mrb[0].mxu0 %v571
        %v642 = vpop.f32.mrb[0].mxu0
        %v643 = vadd.f32 %v562, %v642
        %v644 = vpop.f32.mrb[0].mxu0
        %645 = vmatprep.mubr.f32.mxu0 0.0
        %646 = vmatmul.mubr.f32.gmra.mrb[0].mxu0 %v574
        %v647 = vpop.f32.mrb[0].mxu0
        %v648 = vadd.f32 %v567, %v647
        %v649 = vpop.f32.mrb[0].mxu0
        %650 = vdwg.mxu0
        %v651 = vstv %s254
        %v652 = vmul.f32 %v651, %v395
        %v653 = vmul.f32 %v651, %v400
        %v654 = vadd.f32 %v643, %v652
        %v655 = vadd.f32 %v648, %v653
        %656 = vst [vmem:[%s247] sm:$0xff] %v654
        %657 = vst [vmem:[%s247 + $0x8] sm:$0xff] %v655
        %s658 = sand.u32 %s161, 1
        %s659 = scalar_lea.sflag [#allocation5], %s658
        %s660 = sand.u32 %s161, 1
        %s661 = smul.addr %s660, 16
        %s662 = scalar_lea.vmem [#allocation4], %s661
        // Predicated region
        $region45: #{tpu_custom_call.1} parent=43 // pred_check
          %p663 = pneg %p171
        $region46: #{tpu_custom_call.1} parent=43 // pred_check_branch
          %665 = sbr.rel (%p663) target = $region48
        $region47: #{tpu_custom_call.1} parent=43 // pred_region
          %s667 = ssub.s32 256, 256
          %668 = vsyncadd %s659, %s667
          %s669 = smul.addr %s22, 128
          %s670 = scalar_lea.hbm %s7, %s669
          %s671 = sshll.u32 %s662, 4
          %s672 = int_to_ptr.vmem [resolvable:$true] %s671
          %677 = dma.vmem_to_hbm [thread:$0]  %s672, 256, %s670, %s659, 128, 512, 8
        $region48: #{tpu_custom_call.1} parent=43 // pred_fallthru
          _
      $region44: #{tpu_custom_call.1} parent=5 // pred_fallthru
        _
      %p678 = scmp.le.s32.totalorder 2, %s17
      // Predicated region
      $region49: #{tpu_custom_call.1} parent=5 // pred_check
        %p679 = pneg %p678
      $region50: #{tpu_custom_call.1} parent=5 // pred_check_branch
        %681 = sbr.rel (%p679) target = $region52
      $region51: #{tpu_custom_call.1} parent=5 // pred_region
        %s682 = ssub.s32 %s17, 2
        // Predicated region
        $region53: #{tpu_custom_call.1} parent=51 // pred_check
          %p683 = pneg %p177
        $region54: #{tpu_custom_call.1} parent=51 // pred_check_branch
          %685 = sbr.rel (%p683) target = $region56
        $region55: #{tpu_custom_call.1} parent=51 // pred_region
          %s686 = sand.u32 %s162, 1
          %s687 = scalar_lea.sflag [#allocation5], %s686
          %s688 = sand.u32 %s162, 1
          %s689 = smul.addr %s688, 16
          %s690 = scalar_lea.vmem [#allocation4], %s689
          %691 = dma.done %s687, 256
        $region56: #{tpu_custom_call.1} parent=51 // pred_fallthru
          _
      $region52: #{tpu_custom_call.1} parent=5 // pred_fallthru
        _
    $region6: #{tpu_custom_call.1} parent=1 // loop_footer
      %s21 = sadd.s32 1, %s17
    $region7: #{tpu_custom_call.1} parent=1 // loop_footer_branch
      %16 = sbr.rel target = $region3
    $region8: #{tpu_custom_call.1} parent=1 // loop_exit
      _
    %692 = vsyncpa [#allocation5], 1
    %s693 = scalar_lea.sflag [#allocation5], 1
    %694 = vsyncpa %s693, 1

</llo_original>
